<compile_context>
chip_gen: v5e
topology: v5e:2x2
jax: 0.10.0
libtpu: 0.0.40
codegen_flags: <defaults>
</compile_context>

<pallas_src>
import functools
import math

import jax
import jax.numpy as jnp
from jax import lax
from jax.experimental import pallas as pl
from jax.experimental.pallas import tpu as pltpu


def _bce_kernel(preds_ref, targs_ref, out_ref, acc_ref, *,
                n_rows, n_cols, tbc, ts, cbpg, acc_rows,
                rows_may_mask, cols_may_mask):
    g = pl.program_id(0)          # column-group index (parallel)
    r = pl.program_id(1)          # row-block index    (parallel)
    k = pl.program_id(2)          # column-block index within group (reduction)

    @pl.when(k == 0)
    def _():
        acc_ref[...] = jnp.zeros_like(acc_ref)

    # Native-dtype tiles arrive via DMA; cast to f32 on the VPU.
    x = preds_ref[...].astype(jnp.float32)
    t = targs_ref[...].astype(jnp.float32)

    # Numerically stable BCE-with-logits (matches torch.nn.BCEWithLogitsLoss):
    #   l(x, t) = max(x, 0) - x*t + log1p(exp(-|x|))
    bce = jnp.maximum(x, 0.0) - x * t + jnp.log1p(jnp.exp(-jnp.abs(x)))

    def _accumulate(vals):
        # Full-sublane accumulation: fold (tbc, ts) -> (acc_rows, ts) with VALU adds.
        acc_ref[...] += vals.reshape(tbc // acc_rows, acc_rows, ts).sum(axis=0)

    if rows_may_mask or cols_may_mask:
        col_block = g * cbpg + k
        conds = []
        if rows_may_mask:
            conds.append((r + 1) * tbc > n_rows)
        if cols_may_mask:
            conds.append((col_block + 1) * ts > n_cols)
        is_edge = conds[0]
        for c in conds[1:]:
            is_edge = jnp.logical_or(is_edge, c)

        @pl.when(is_edge)
        def _():
            # Broadcastable iotas: (tbc,1) and (1,ts), not two full (tbc,ts) iotas.
            row = r * tbc + lax.broadcasted_iota(jnp.int32, (tbc, 1), 0)
            col = col_block * ts + lax.broadcasted_iota(jnp.int32, (1, ts), 1)
            mask = (row < n_rows) & (col < n_cols)
            _accumulate(jnp.where(mask, bce, 0.0))

        @pl.when(jnp.logical_not(is_edge))
        def _():
            _accumulate(bce)
    else:
        _accumulate(bce)

    @pl.when(k == pl.num_programs(2) - 1)
    def _():
        out_ref[...] = acc_ref[...].reshape(out_ref.shape)


def _choose_tiles(bc: int, s: int, itemsize: int):
    """Pick (tbc, ts): ~8 MiB per input tile, (8,128)-legal, dtype-aware."""
    target_bytes = 8 * 1024 * 1024
    max_ts = 4096 if itemsize >= 4 else 8192
    ts = s if s <= max_ts else max_ts
    if bc <= 512:
        tbc = bc                              # full second-minor dim: always legal
    else:
        want_rows = max(8, target_bytes // (ts * itemsize))
        tbc = min((want_rows // 8) * 8, 4096)
        tbc = max(tbc, 8)
        if tbc > bc:
            tbc = (bc // 8) * 8               # stay a sublane multiple, <= bc
    return tbc, ts


def bce_with_logits_loss(preds: jax.Array, targs: jax.Array,
                         *, tile_override=None) -> jax.Array:
    """BCEWrappedLoss forward: mean BCE-with-logits over all elements (scalar f32)."""
    assert preds.ndim > 2, preds.shape
    assert preds.shape == targs.shape, (preds.shape, targs.shape)

    bc = preds.shape[0] * preds.shape[1]
    s = math.prod(preds.shape[2:])
    n_total = bc * s

    # Reshape only -- no dtype cast in the wrapper (HBM traffic stays native width).
    preds2d = preds.reshape(bc, s)
    targs2d = targs.reshape(bc, s)

    itemsize = max(preds.dtype.itemsize, targs.dtype.itemsize)
    if tile_override is not None:
        tbc, ts = tile_override               # testing hook for edge/group paths
    else:
        tbc, ts = _choose_tiles(bc, s, itemsize)

    n_rb = pl.cdiv(bc, tbc)                   # row blocks
    n_cb = pl.cdiv(s, ts)                     # total column blocks
    # v7x has 2 TensorCores: guarantee a parallel axis of extent >= 2 when possible.
    n_groups = 1 if n_rb >= 2 else min(2, n_cb)
    cbpg = pl.cdiv(n_cb, n_groups)            # column blocks per group

    acc_rows = math.gcd(tbc, 8)
    rows_may_mask = (bc % tbc) != 0
    cols_may_mask = ((s % ts) != 0) or (cbpg * n_groups != n_cb)

    grid = (n_groups, n_rb, cbpg)

    kernel = functools.partial(
        _bce_kernel, n_rows=bc, n_cols=s, tbc=tbc, ts=ts, cbpg=cbpg,
        acc_rows=acc_rows, rows_may_mask=rows_may_mask, cols_may_mask=cols_may_mask)

    def in_map(g, r, k):
        # Clamp so padded column blocks of the last group stay in-bounds; the kernel
        # masks their contribution to zero via the (unclamped) global column index.
        return (r, jnp.minimum(g * cbpg + k, n_cb - 1))

    def out_map(g, r, k):
        return (g * n_rb + r, 0, 0)

    cost = pl.CostEstimate(
        flops=7 * n_total,
        transcendentals=2 * n_total,
        bytes_accessed=n_total * (preds.dtype.itemsize + targs.dtype.itemsize)
                       + n_groups * n_rb * acc_rows * ts * 4,
    )

    partials = pl.pallas_call(
        kernel,
        out_shape=jax.ShapeDtypeStruct((n_groups * n_rb, acc_rows, ts), jnp.float32),
        grid_spec=pltpu.PrefetchScalarGridSpec(
            num_scalar_prefetch=0,
            grid=grid,
            in_specs=[
                pl.BlockSpec((tbc, ts), in_map),
                pl.BlockSpec((tbc, ts), in_map),
            ],
            out_specs=pl.BlockSpec((1, acc_rows, ts), out_map),
            scratch_shapes=[pltpu.VMEM((acc_rows, ts), jnp.float32)],
        ),
        compiler_params=pltpu.CompilerParams(
            dimension_semantics=("parallel", "parallel", "arbitrary"),
            vmem_limit_bytes=48 * 1024 * 1024,
        ),
        cost_estimate=cost,
    )(preds2d, targs2d)

    # Tiny epilogue in plain JAX: total sum of per-block partials, divided by N.
    return jnp.sum(partials) / jnp.float32(n_total)


def _bce_ref(preds, targs):
    # Pure-JAX reference mirroring torch.nn.BCEWithLogitsLoss(reduction='mean').
    x = preds.astype(jnp.float32)
    t = targs.astype(jnp.float32)
    bce = jnp.maximum(x, 0.0) - x * t + jnp.log1p(jnp.exp(-jnp.abs(x)))
    return jnp.mean(bce)


if __name__ == "__main__":
    key = jax.random.PRNGKey(0)
    k1, k2, k3, k4 = jax.random.split(key, 4)

    # Main case: (B, C, H, W) = (2, 4, 16, 16), f32 logits, binary targets.
    B, C, H, W = 2, 4, 16, 16
    preds = jax.random.normal(k1, (B, C, H, W), dtype=jnp.float32)
    targs = (jax.random.uniform(k2, (B, C, H, W)) > 0.5).astype(jnp.float32)

    out = jax.block_until_ready(bce_with_logits_loss(preds, targs))
    ref = _bce_ref(preds, targs)
    assert jnp.allclose(out, ref, atol=1e-5, rtol=1e-5), (out, ref)

    # Native-dtype path: bf16 in, f32 math in-kernel only.
    preds_bf16 = preds.astype(jnp.bfloat16)
    targs_bf16 = targs.astype(jnp.bfloat16)
    out_bf16 = jax.block_until_ready(bce_with_logits_loss(preds_bf16, targs_bf16))
    ref_bf16 = _bce_ref(preds_bf16, targs_bf16)
    assert jnp.allclose(out_bf16, ref_bf16, atol=1e-5, rtol=1e-5), (out_bf16, ref_bf16)

    # Exercise the gated edge-mask path + multi-block reduction (partial row/col blocks).
    preds_e = jax.random.normal(k3, (4, 5, 12, 12), dtype=jnp.float32)     # bc=20, s=144
    targs_e = (jax.random.uniform(k4, (4, 5, 12, 12)) > 0.5).astype(jnp.float32)
    out_e = jax.block_until_ready(
        bce_with_logits_loss(preds_e, targs_e, tile_override=(8, 128)))
    ref_e = _bce_ref(preds_e, targs_e)
    assert jnp.allclose(out_e, ref_e, atol=1e-5, rtol=1e-5), (out_e, ref_e)

    # Exercise the column-group (megacore) split with clamped/padded column blocks.
    preds_g = jax.random.normal(k3, (1, 1, 8, 300), dtype=jnp.float32)      # bc=1, s=2400
    targs_g = (jax.random.uniform(k4, (1, 1, 8, 300)) > 0.5).astype(jnp.float32)
    out_g = jax.block_until_ready(
        bce_with_logits_loss(preds_g, targs_g, tile_override=(1, 128)))
    ref_g = _bce_ref(preds_g, targs_g)
    assert jnp.allclose(out_g, ref_g, atol=1e-5, rtol=1e-5), (out_g, ref_g)

    print("KERNEL_OK")
</pallas_src>

<mosaic_0001>
module attributes {stable_mosaic.version = 11 : i64} {
  func.func @_bce_kernel(%arg0: i32, %arg1: i32, %arg2: i32, %arg3: memref<8x256xf32, #tpu.memory_space<vmem>>, %arg4: memref<8x256xf32, #tpu.memory_space<vmem>>, %arg5: memref<1x8x256xf32, #tpu.memory_space<vmem>>, %arg6: memref<8x256xf32, #tpu.memory_space<vmem>>) attributes {dimension_semantics = [#tpu.dimension_semantics<parallel>, #tpu.dimension_semantics<parallel>, #tpu.dimension_semantics<arbitrary>], iteration_bounds = array<i64: 1, 1, 1>, scalar_prefetch = 0 : i64, scratch_operands = 1 : i64, tpu.core_type = #tpu.core_type<tc>, window_params = [{transform_indices = @transform_0, window_bounds = array<i64: 8, 256>}, {transform_indices = @transform_1, window_bounds = array<i64: 8, 256>}, {transform_indices = @transform_2, window_bounds = array<i64: 1, 8, 256>}]} {
    %c0_i32 = arith.constant 0 : i32
    %0 = arith.cmpi eq, %arg2, %c0_i32 : i32
    %1 = arith.extui %0 : i1 to i32
    %c0_i32_0 = arith.constant 0 : i32
    %2 = arith.cmpi ne, %1, %c0_i32_0 : i32
    scf.if %2 {
      %cst_12 = arith.constant 0.000000e+00 : f32
      %23 = vector.broadcast %cst_12 : f32 to vector<8x256xf32>
      %c0_13 = arith.constant 0 : index
      %c0_14 = arith.constant 0 : index
      %24 = vector.load %arg6[%c0_13, %c0_14] : memref<8x256xf32, #tpu.memory_space<vmem>>, vector<8x256xf32>
      tpu.vector_store %arg6[%c0_13, %c0_14], %23 {strides = array<i32>} : memref<8x256xf32, #tpu.memory_space<vmem>>, vector<8x256xf32>,
    } else {
    }
    %c0 = arith.constant 0 : index
    %c0_1 = arith.constant 0 : index
    %3 = vector.load %arg3[%c0, %c0_1] : memref<8x256xf32, #tpu.memory_space<vmem>>, vector<8x256xf32>
    %c0_2 = arith.constant 0 : index
    %c0_3 = arith.constant 0 : index
    %4 = vector.load %arg4[%c0_2, %c0_3] : memref<8x256xf32, #tpu.memory_space<vmem>>, vector<8x256xf32>
    %cst = arith.constant 0.000000e+00 : f32
    %5 = vector.broadcast %cst : f32 to vector<8x256xf32>
    %6 = arith.maximumf %3, %5 : vector<8x256xf32>
    %7 = arith.mulf %3, %4 : vector<8x256xf32>
    %8 = arith.subf %6, %7 : vector<8x256xf32>
    %9 = math.absf %3 : vector<8x256xf32>
    %cst_4 = arith.constant 0.000000e+00 : f32
    %10 = vector.broadcast %cst_4 : f32 to vector<8x256xf32>
    %11 = arith.subf %10, %9 : vector<8x256xf32>
    %12 = math.exp %11 : vector<8x256xf32>
    %13 = math.log1p %12 : vector<8x256xf32>
    %14 = arith.addf %8, %13 : vector<8x256xf32>
    %c0_5 = arith.constant 0 : index
    %c0_6 = arith.constant 0 : index
    %15 = vector.load %arg6[%c0_5, %c0_6] : memref<8x256xf32, #tpu.memory_space<vmem>>, vector<8x256xf32>
    %16 = vector.shape_cast %14 : vector<8x256xf32> to vector<1x8x256xf32>
    %cst_7 = arith.constant dense<0.000000e+00> : vector<8x256xf32>
    %17 = vector.multi_reduction <add>, %16, %cst_7 [0] : vector<1x8x256xf32> to vector<8x256xf32>
    %18 = arith.addf %15, %17 : vector<8x256xf32>
    %c0_8 = arith.constant 0 : index
    %c0_9 = arith.constant 0 : index
    %19 = vector.load %arg6[%c0_8, %c0_9] : memref<8x256xf32, #tpu.memory_space<vmem>>, vector<8x256xf32>
    tpu.vector_store %arg6[%c0_8, %c0_9], %18 {strides = array<i32>} : memref<8x256xf32, #tpu.memory_space<vmem>>, vector<8x256xf32>,
    %c0_i32_10 = arith.constant 0 : i32
    %20 = arith.cmpi eq, %arg2, %c0_i32_10 : i32
    %21 = arith.extui %20 : i1 to i32
    %c0_i32_11 = arith.constant 0 : i32
    %22 = arith.cmpi ne, %21, %c0_i32_11 : i32
    scf.if %22 {
      %c0_12 = arith.constant 0 : index
      %c0_13 = arith.constant 0 : index
      %23 = vector.load %arg6[%c0_12, %c0_13] : memref<8x256xf32, #tpu.memory_space<vmem>>, vector<8x256xf32>
      %24 = vector.shape_cast %23 : vector<8x256xf32> to vector<1x8x256xf32>
      %c0_14 = arith.constant 0 : index
      %c0_15 = arith.constant 0 : index
      %c0_16 = arith.constant 0 : index
      %25 = vector.load %arg5[%c0_14, %c0_15, %c0_16] : memref<1x8x256xf32, #tpu.memory_space<vmem>>, vector<1x8x256xf32>
      tpu.vector_store %arg5[%c0_14, %c0_15, %c0_16], %24 {strides = array<i32>} : memref<1x8x256xf32, #tpu.memory_space<vmem>>, vector<1x8x256xf32>,
    } else {
    }
    return
  }
  func.func @transform_0(%arg0: i32, %arg1: i32, %arg2: i32) -> (i32, i32) {
    %c1_i32 = arith.constant 1 : i32
    %0 = arith.muli %arg0, %c1_i32 : i32
    %1 = arith.addi %0, %arg2 : i32
    %c0_i32 = arith.constant 0 : i32
    %2 = arith.minsi %1, %c0_i32 : i32
    %c0_i32_0 = arith.constant 0 : i32
    return %arg1, %2 : i32, i32
  }
  func.func @transform_1(%arg0: i32, %arg1: i32, %arg2: i32) -> (i32, i32) {
    %c1_i32 = arith.constant 1 : i32
    %0 = arith.muli %arg0, %c1_i32 : i32
    %1 = arith.addi %0, %arg2 : i32
    %c0_i32 = arith.constant 0 : i32
    %2 = arith.minsi %1, %c0_i32 : i32
    %c0_i32_0 = arith.constant 0 : i32
    return %arg1, %2 : i32, i32
  }
  func.func @transform_2(%arg0: i32, %arg1: i32, %arg2: i32) -> (i32, i32, i32) {
    %c1_i32 = arith.constant 1 : i32
    %0 = arith.muli %arg0, %c1_i32 : i32
    %1 = arith.addi %0, %arg1 : i32
    %c0_i32 = arith.constant 0 : i32
    %c0_i32_0 = arith.constant 0 : i32
    %c0_i32_1 = arith.constant 0 : i32
    return %1, %c0_i32, %c0_i32_0 : i32, i32, i32
  }
}

</mosaic_0001>

<llo_original>
// kernel: tpu_custom_call.1
$region0: #{tpu_custom_call.1}
  #allocation0 [shape = 'u32[]', space=smem, size = 0x4, offset = 0x4, fixed_abs, tag = 'smem constant byte address 0x4 - core index']
  #allocation1 [shape = 'u32[72,128]{1,0:T(1,128)}', space=vmem, size = 0x9000, scoped, tag = 'internal scratch']
  #allocation2 [shape = 'f32[8,256]{1,0:T(8,128)}', space=vmem, size = 0x2000, scoped, tag = 'scratch operand']
  %s0 = inlined_call_operand.hbm [shape: f32[8,256], index: 0, kind: input, shape index: {}]
  %s1 = inlined_call_operand.hbm [shape: f32[8,256], index: 1, kind: input, shape index: {}]
  %s2 = inlined_call_operand.hbm [shape: f32[1,8,256], index: 2, kind: output, shape index: {}]
  %s3 = sld [smem:[#allocation0]]
  $region34: #{tpu_custom_call.1} parent=0
    _
  %s5 = ssub.s32 1, %s3
  %s6 = scalar_select 0, %s5, %s3
  $region1: #{tpu_custom_call.1} parent=0
    #allocation3 [shape = 'u8[8192]{0}', space=vmem, size = 0x2000, scoped, tag = 'input window, operand 0, single buffered']
    #allocation4 [shape = 's32[1]{0}', space=sflag, size = 0x4, scoped, tag = 'scoped memory for tpu_custom_call.1']
    #allocation5 [shape = 's32[1]{0}', space=sflag, size = 0x4, scoped, tag = 'scoped memory for tpu_custom_call.1']
    #allocation6 [shape = 'u8[8192]{0}', space=vmem, size = 0x2000, scoped, tag = 'input window, operand 1, single buffered']
    #allocation7 [shape = 's32[1]{0}', space=sflag, size = 0x4, scoped, tag = 'scoped memory for tpu_custom_call.1']
    #allocation8 [shape = 'u8[8192]{0}', space=vmem, size = 0x2000, scoped, tag = 'output window, operand 0, single buffered']
    %7 = vsyncpa [#allocation4], 0
    %8 = vsyncpa [#allocation7], 0
    %9 = vsyncpa [#allocation5], 0
    // Predicated region
    $region2: #{tpu_custom_call.1} parent=1 // pred_check
      _
    $region3: #{tpu_custom_call.1} parent=1 // pred_check_branch
      %11 = sbr.rel (0) target = $region5
    $region4: #{tpu_custom_call.1} parent=1 // pred_region
      %s12 = sadd.s32 0, 0
      %p13 = scmp.lt.s32.totalorder %s12, 0
      %s14 = scalar_select %p13, %s12, 0
      %s15 = smul.u32 2, %s14
      %17 = vsyncadd [#allocation4], 0
      %s18 = smul.addr %s15, 8
      %s19 = scalar_lea.hbm %s0, %s18
      %s21 = sshll.u32 %s19, 4
      %s22 = int_to_ptr.hbm [resolvable:$true] %s21
      %s23 = sshll.u32 [#allocation3], 4
      %s24 = int_to_ptr.vmem [resolvable:$true] %s23
      %26 = dma.hbm_to_vmem [thread:$0]  %s22, 256, %s24, [#allocation4]
    $region5: #{tpu_custom_call.1} parent=1 // pred_fallthru
      _
    // Predicated region
    $region6: #{tpu_custom_call.1} parent=1 // pred_check
      _
    $region7: #{tpu_custom_call.1} parent=1 // pred_check_branch
      %28 = sbr.rel (0) target = $region9
    $region8: #{tpu_custom_call.1} parent=1 // pred_region
      %s29 = sadd.s32 0, 0
      %p30 = scmp.lt.s32.totalorder %s29, 0
      %s31 = scalar_select %p30, %s29, 0
      %s32 = smul.u32 2, %s31
      %34 = vsyncadd [#allocation7], 0
      %s35 = smul.addr %s32, 8
      %s36 = scalar_lea.hbm %s1, %s35
      %s38 = sshll.u32 %s36, 4
      %s39 = int_to_ptr.hbm [resolvable:$true] %s38
      %s40 = sshll.u32 [#allocation6], 4
      %s41 = int_to_ptr.vmem [resolvable:$true] %s40
      %43 = dma.hbm_to_vmem [thread:$0]  %s39, 256, %s41, [#allocation7]
    $region9: #{tpu_custom_call.1} parent=1 // pred_fallthru
      _
    // Predicated region
    $region10: #{tpu_custom_call.1} parent=1 // pred_check
      _
    $region11: #{tpu_custom_call.1} parent=1 // pred_check_branch
      %45 = sbr.rel (0) target = $region13
    $region12: #{tpu_custom_call.1} parent=1 // pred_region
      %47 = dma.done [#allocation4], 256
    $region13: #{tpu_custom_call.1} parent=1 // pred_fallthru
      _
    // Predicated region
    $region14: #{tpu_custom_call.1} parent=1 // pred_check
      _
    $region15: #{tpu_custom_call.1} parent=1 // pred_check_branch
      %49 = sbr.rel (0) target = $region17
    $region16: #{tpu_custom_call.1} parent=1 // pred_region
      %51 = dma.done [#allocation7], 256
    $region17: #{tpu_custom_call.1} parent=1 // pred_fallthru
      _
    %s52 = sadd.s32 0, 0
    %p53 = scmp.lt.s32.totalorder %s52, 0
    %s54 = scalar_select %p53, %s52, 0
    %s55 = smul.u32 2, %s54
    %s56 = sadd.s32 0, 0
    %p57 = scmp.lt.s32.totalorder %s56, 0
    %s58 = scalar_select %p57, %s56, 0
    %s59 = smul.u32 2, %s58
    %s60 = sadd.s32 0, 0
    %p61 = scmp.eq.s32.totalorder 0, 0
    // Predicated region
    $region18: #{tpu_custom_call.1} parent=1 // pred_check
      %p62 = pneg %p61
    $region19: #{tpu_custom_call.1} parent=1 // pred_check_branch
      %64 = sbr.rel (%p62) target = $region21
    $region20: #{tpu_custom_call.1} parent=1 // pred_region
      %65 = vst [vmem:[#allocation2] sm:$0xff] 0.0
      %66 = vst [vmem:[#allocation2 + $0x8] sm:$0xff] 0.0
    $region21: #{tpu_custom_call.1} parent=1 // pred_fallthru
      _
    %v67 = vld [vmem:[#allocation3] sm:$0xff]
    %v68 = vld [vmem:[#allocation3 + $0x8] sm:$0xff]
    %v69 = vld [vmem:[#allocation6] sm:$0xff]
    %v70 = vld [vmem:[#allocation6 + $0x8] sm:$0xff]
    %v71 = vmax.f32 %v67, 0.0
    %v72 = vmax.f32 %v68, 0.0
    %v73 = vmul.f32 %v67, %v69
    %v74 = vmul.f32 %v68, %v70
    %v75 = vsub.f32 %v71, %v73
    %v76 = vsub.f32 %v72, %v74
    %v77 = vand.u32 2147483647, %v67
    %v78 = vand.u32 2147483647, %v68
    %v79 = vsub.f32 0.0, %v77
    %v80 = vsub.f32 0.0, %v78
    %v81 = vmul.f32 %v79, 1.442695
    %v82 = vpow.pop %v81
    %v83 = vmul.f32 %v80, 1.442695
    %v84 = vpow.pop %v83
    %v85 = vadd.f32 %v82, 1.0
    %v86 = vlog2.pop %v85
    %v87 = vmul.f32 %v86, 0.6931472
    %v88 = vmul.f32 -0.5, %v82
    %v89 = vadd.f32 %v88, 1.0
    %v90 = vmul.f32 %v89, %v82
    %v91 = vand.u32 2147483647, %v82
    %vm92 = vcmp.lt.f32.partialorder %v91, 0.0004427343
    %v93 = vsel %vm92, %v90, %v87
    %v94 = vadd.f32 %v84, 1.0
    %v95 = vlog2.pop %v94
    %v96 = vmul.f32 %v95, 0.6931472
    %v97 = vmul.f32 -0.5, %v84
    %v98 = vadd.f32 %v97, 1.0
    %v99 = vmul.f32 %v98, %v84
    %v100 = vand.u32 2147483647, %v84
    %vm101 = vcmp.lt.f32.partialorder %v100, 0.0004427343
    %v102 = vsel %vm101, %v99, %v96
    %v103 = vadd.f32 %v75, %v93
    %v104 = vadd.f32 %v76, %v102
    %v105 = vld [vmem:[#allocation2] sm:$0xff]
    %v106 = vld [vmem:[#allocation2 + $0x8] sm:$0xff]
    %v107 = vadd.f32 %v103, 0.0
    %v108 = vadd.f32 %v104, 0.0
    %v109 = vadd.f32 %v105, %v107
    %v110 = vadd.f32 %v106, %v108
    %111 = vst [vmem:[#allocation2] sm:$0xff] %v109
    %112 = vst [vmem:[#allocation2 + $0x8] sm:$0xff] %v110
    // Predicated region
    $region22: #{tpu_custom_call.1} parent=1 // pred_check
      %p113 = pneg %p61
    $region23: #{tpu_custom_call.1} parent=1 // pred_check_branch
      %115 = sbr.rel (%p113) target = $region25
    $region24: #{tpu_custom_call.1} parent=1 // pred_region
      %v116 = vld [vmem:[#allocation2] sm:$0xff]
      %v117 = vld [vmem:[#allocation2 + $0x8] sm:$0xff]
      %118 = vst [vmem:[#allocation8] sm:$0xff] %v116
      %119 = vst [vmem:[#allocation8 + $0x8] sm:$0xff] %v117
    $region25: #{tpu_custom_call.1} parent=1 // pred_fallthru
      _
    // Predicated region
    $region26: #{tpu_custom_call.1} parent=1 // pred_check
      _
    $region27: #{tpu_custom_call.1} parent=1 // pred_check_branch
      %121 = sbr.rel (0) target = $region29
    $region28: #{tpu_custom_call.1} parent=1 // pred_region
      %s122 = sadd.s32 0, 0
      %124 = vsyncadd [#allocation5], 0
      %s125 = smul.addr %s122, 2
      %s126 = smul.addr %s125, 8
      %s127 = scalar_lea.hbm %s2, %s126
      %s129 = sshll.u32 [#allocation8], 4
      %s130 = int_to_ptr.vmem [resolvable:$true] %s129
      %s131 = sshll.u32 %s127, 4
      %s132 = int_to_ptr.hbm [resolvable:$true] %s131
      %134 = dma.vmem_to_hbm [thread:$0]  %s130, 256, %s132, [#allocation5]
    $region29: #{tpu_custom_call.1} parent=1 // pred_fallthru
      _
    // Predicated region
    $region30: #{tpu_custom_call.1} parent=1 // pred_check
      _
    $region31: #{tpu_custom_call.1} parent=1 // pred_check_branch
      %136 = sbr.rel (0) target = $region33
    $region32: #{tpu_custom_call.1} parent=1 // pred_region
      %138 = dma.done [#allocation5], 256
    $region33: #{tpu_custom_call.1} parent=1 // pred_fallthru
      _
    %139 = vsyncpa [#allocation4], 1
    %140 = vsyncpa [#allocation7], 1
    %141 = vsyncpa [#allocation5], 1

</llo_original>
